<compile_context>
chip_gen: v7x
topology: tpu7x:2x2x1
jax: 0.10.0
libtpu: 0.0.40
codegen_flags: <defaults>
</compile_context>

<pallas_src>
import functools

import jax
import jax.numpy as jnp
from jax import lax
from jax.experimental import pallas as pl
from jax.experimental.pallas import tpu as pltpu

_LANES = 128
_MAX_TILE_ROWS = 4096  # multiple of 32 -> legal block row count for any dtype


def _iou_kernel(gt_ref, pred_ref, out_ref, acc_ref, *, n_valid):
    i = pl.program_id(0)

    @pl.when(i == 0)
    def _init():
        acc_ref[0] = jnp.int32(0)  # intersection count
        acc_ref[1] = jnp.int32(0)  # pred histogram count
        acc_ref[2] = jnp.int32(0)  # label histogram count

    gt = gt_ref[...].astype(jnp.float32)
    pred = pred_ref[...].astype(jnp.float32)
    tile_rows, lanes = gt.shape

    # Mask out tail padding / out-of-bounds rows of a partial last block using
    # the global flat element index (overflow-safe row/lane comparison).
    row_ids = lax.broadcasted_iota(jnp.int32, (tile_rows, lanes), 0) + i * tile_rows
    lane_ids = lax.broadcasted_iota(jnp.int32, (tile_rows, lanes), 1)
    last_row = n_valid // lanes
    tail = n_valid % lanes
    valid = (row_ids < last_row) | ((row_ids == last_row) & (lane_ids < tail))

    in_pred = (pred >= 0.0) & (pred <= 1.0) & valid
    in_gt = (gt >= 0.0) & (gt <= 1.0) & valid
    inter = (pred == gt) & in_pred

    # Per-tile XLU reductions overlap with the next tile's DMA.
    acc_ref[0] += jnp.sum(inter.astype(jnp.int32))
    acc_ref[1] += jnp.sum(in_pred.astype(jnp.int32))
    acc_ref[2] += jnp.sum(in_gt.astype(jnp.int32))

    @pl.when(i == pl.num_programs(0) - 1)
    def _finalize():
        a_int = acc_ref[0].astype(jnp.float32)
        a_pred = acc_ref[1].astype(jnp.float32)
        a_gt = acc_ref[2].astype(jnp.float32)
        out_ref[0] = a_int / (a_pred + a_gt - a_int)


def jaccard_index_pallas(mask_gt, mask_pred):
    """Returns miou[0] (scalar f32) exactly as the PyTorch module's forward."""
    gt_flat = jnp.reshape(mask_gt, (-1,))
    pred_flat = jnp.reshape(mask_pred, (-1,))
    n = gt_flat.shape[0]
    assert pred_flat.shape[0] == n

    rows = pl.cdiv(n, _LANES)

    def to_2d(flat):
        pad = rows * _LANES - n
        if pad:
            # Rare tail path (pixel count not a multiple of 128); padded values
            # are excluded by the in-kernel index mask, not by sentinels.
            flat = jnp.pad(flat, (0, pad))
        return flat.reshape(rows, _LANES)

    gt2 = to_2d(gt_flat)
    pred2 = to_2d(pred_flat)

    if rows <= _MAX_TILE_ROWS:
        tile_rows = rows            # block == full dim: always a legal block
    else:
        tile_rows = _MAX_TILE_ROWS  # multiple of (8|16|32): legal for any dtype
    grid = (pl.cdiv(rows, tile_rows),)

    kernel = functools.partial(_iou_kernel, n_valid=n)

    # TODO(synk): on v7x a leading size-2 "parallel" axis could split the rows
    # across both TensorCores; kept single-accumulator for simplicity here.
    out = pl.pallas_call(
        kernel,
        out_shape=jax.ShapeDtypeStruct((1,), jnp.float32),
        grid_spec=pltpu.PrefetchScalarGridSpec(
            num_scalar_prefetch=0,
            grid=grid,
            in_specs=[
                pl.BlockSpec((tile_rows, _LANES), lambda i: (i, 0)),
                pl.BlockSpec((tile_rows, _LANES), lambda i: (i, 0)),
            ],
            out_specs=pl.BlockSpec(memory_space=pltpu.SMEM),
            scratch_shapes=[pltpu.SMEM((3,), jnp.int32)],
        ),
        compiler_params=pltpu.CompilerParams(
            dimension_semantics=("arbitrary",),
        ),
    )(gt2, pred2)
    return out[0]


def _reference_iou(mask_gt, mask_pred):
    gt = jnp.asarray(mask_gt, jnp.float32).reshape(-1)
    pred = jnp.asarray(mask_pred, jnp.float32).reshape(-1)
    in_pred = (pred >= 0.0) & (pred <= 1.0)
    in_gt = (gt >= 0.0) & (gt <= 1.0)
    n_int = jnp.sum(((pred == gt) & in_pred).astype(jnp.float32))
    n_pred = jnp.sum(in_pred.astype(jnp.float32))
    n_gt = jnp.sum(in_gt.astype(jnp.float32))
    return n_int / (n_pred + n_gt - n_int)


if __name__ == "__main__":
    key = jax.random.PRNGKey(0)
    kg, kp = jax.random.split(key)
    # Binary segmentation masks, NCHW layout: [batch=2, channels=1, 16, 16]
    mask_gt = (jax.random.uniform(kg, (2, 1, 16, 16)) > 0.5).astype(jnp.float32)
    mask_pred = (jax.random.uniform(kp, (2, 1, 16, 16)) > 0.5).astype(jnp.float32)

    iou = jaccard_index_pallas(mask_gt, mask_pred)
    jax.block_until_ready(iou)

    ref = _reference_iou(mask_gt, mask_pred)
    assert jnp.allclose(iou, ref, atol=1e-6), (iou, ref)
    print("KERNEL_OK")
</pallas_src>

<mosaic_0001>
module attributes {stable_mosaic.version = 11 : i64} {
  func.func @_iou_kernel(%arg0: i32, %arg1: memref<4x128xf32, #tpu.memory_space<vmem>>, %arg2: memref<4x128xf32, #tpu.memory_space<vmem>>, %arg3: memref<1xf32, #tpu.memory_space<smem>>, %arg4: memref<3xi32, #tpu.memory_space<smem>>) attributes {dimension_semantics = [#tpu.dimension_semantics<arbitrary>], iteration_bounds = array<i64: 1>, scalar_prefetch = 0 : i64, scratch_operands = 1 : i64, tpu.core_type = #tpu.core_type<tc>, window_params = [{transform_indices = @transform_0, window_bounds = array<i64: 4, 128>}, {transform_indices = @transform_1, window_bounds = array<i64: 4, 128>}, {transform_indices = @transform_2, window_bounds = array<i64: 1>}]} {
    %c0_i32 = arith.constant 0 : i32
    %0 = arith.cmpi eq, %arg0, %c0_i32 : i32
    %1 = arith.extui %0 : i1 to i32
    %c0_i32_0 = arith.constant 0 : i32
    %2 = arith.cmpi ne, %1, %c0_i32_0 : i32
    scf.if %2 {
      %c0_i32_19 = arith.constant 0 : i32
      %c0_20 = arith.constant 0 : index
      %59 = memref.load %arg4[%c0_20] : memref<3xi32, #tpu.memory_space<smem>>
      memref.store %c0_i32_19, %arg4[%c0_20] : memref<3xi32, #tpu.memory_space<smem>>
      %c0_i32_21 = arith.constant 0 : i32
      %c1_22 = arith.constant 1 : index
      %60 = memref.load %arg4[%c1_22] : memref<3xi32, #tpu.memory_space<smem>>
      memref.store %c0_i32_21, %arg4[%c1_22] : memref<3xi32, #tpu.memory_space<smem>>
      %c0_i32_23 = arith.constant 0 : i32
      %c2_24 = arith.constant 2 : index
      %61 = memref.load %arg4[%c2_24] : memref<3xi32, #tpu.memory_space<smem>>
      memref.store %c0_i32_23, %arg4[%c2_24] : memref<3xi32, #tpu.memory_space<smem>>
    } else {
    }
    %c0 = arith.constant 0 : index
    %c0_1 = arith.constant 0 : index
    %3 = vector.load %arg1[%c0, %c0_1] : memref<4x128xf32, #tpu.memory_space<vmem>>, vector<4x128xf32>
    %c0_2 = arith.constant 0 : index
    %c0_3 = arith.constant 0 : index
    %4 = vector.load %arg2[%c0_2, %c0_3] : memref<4x128xf32, #tpu.memory_space<vmem>>, vector<4x128xf32>
    %5 = tpu.iota {dimensions = array<i32: 0>} : vector<4x128xi32>
    %c4_i32 = arith.constant 4 : i32
    %6 = arith.muli %arg0, %c4_i32 : i32
    %7 = vector.broadcast %6 : i32 to vector<4x128xi32>
    %8 = arith.addi %5, %7 : vector<4x128xi32>
    %9 = tpu.iota {dimensions = array<i32: 1>} : vector<4x128xi32>
    %c4_i32_4 = arith.constant 4 : i32
    %10 = vector.broadcast %c4_i32_4 : i32 to vector<4x128xi32>
    %11 = arith.cmpi slt, %8, %10 : vector<4x128xi32>
    %c4_i32_5 = arith.constant 4 : i32
    %12 = vector.broadcast %c4_i32_5 : i32 to vector<4x128xi32>
    %13 = arith.cmpi eq, %8, %12 : vector<4x128xi32>
    %c0_i32_6 = arith.constant 0 : i32
    %14 = vector.broadcast %c0_i32_6 : i32 to vector<4x128xi32>
    %15 = arith.cmpi slt, %9, %14 : vector<4x128xi32>
    %16 = arith.andi %13, %15 : vector<4x128xi1>
    %17 = arith.ori %11, %16 : vector<4x128xi1>
    %cst = arith.constant 0.000000e+00 : f32
    %18 = vector.broadcast %cst : f32 to vector<4x128xf32>
    %19 = arith.cmpf oge, %4, %18 : vector<4x128xf32>
    %cst_7 = arith.constant 1.000000e+00 : f32
    %20 = vector.broadcast %cst_7 : f32 to vector<4x128xf32>
    %21 = arith.cmpf ole, %4, %20 : vector<4x128xf32>
    %22 = arith.andi %19, %21 : vector<4x128xi1>
    %23 = arith.andi %22, %17 : vector<4x128xi1>
    %cst_8 = arith.constant 0.000000e+00 : f32
    %24 = vector.broadcast %cst_8 : f32 to vector<4x128xf32>
    %25 = arith.cmpf oge, %3, %24 : vector<4x128xf32>
    %cst_9 = arith.constant 1.000000e+00 : f32
    %26 = vector.broadcast %cst_9 : f32 to vector<4x128xf32>
    %27 = arith.cmpf ole, %3, %26 : vector<4x128xf32>
    %28 = arith.andi %25, %27 : vector<4x128xi1>
    %29 = arith.andi %28, %17 : vector<4x128xi1>
    %30 = arith.cmpf oeq, %4, %3 : vector<4x128xf32>
    %31 = arith.andi %30, %23 : vector<4x128xi1>
    %c0_10 = arith.constant 0 : index
    %32 = memref.load %arg4[%c0_10] : memref<3xi32, #tpu.memory_space<smem>>
    %33 = arith.extui %31 : vector<4x128xi1> to vector<4x128xi32>
    %34 = vector.shape_cast %33 : vector<4x128xi32> to vector<1x4x128xi32>
    %cst_11 = arith.constant dense<0> : vector<1xi32>
    %35 = vector.multi_reduction <add>, %34, %cst_11 [1, 2] : vector<1x4x128xi32> to vector<1xi32>
    %36 = vector.shape_cast %35 : vector<1xi32> to vector<1x1x1xi32>
    %37 = vector.extract %36[0, 0, 0] : i32 from vector<1x1x1xi32>
    %38 = arith.addi %32, %37 : i32
    %c0_12 = arith.constant 0 : index
    %39 = memref.load %arg4[%c0_12] : memref<3xi32, #tpu.memory_space<smem>>
    memref.store %38, %arg4[%c0_12] : memref<3xi32, #tpu.memory_space<smem>>
    %c1 = arith.constant 1 : index
    %40 = memref.load %arg4[%c1] : memref<3xi32, #tpu.memory_space<smem>>
    %41 = arith.extui %23 : vector<4x128xi1> to vector<4x128xi32>
    %42 = vector.shape_cast %41 : vector<4x128xi32> to vector<1x4x128xi32>
    %cst_13 = arith.constant dense<0> : vector<1xi32>
    %43 = vector.multi_reduction <add>, %42, %cst_13 [1, 2] : vector<1x4x128xi32> to vector<1xi32>
    %44 = vector.shape_cast %43 : vector<1xi32> to vector<1x1x1xi32>
    %45 = vector.extract %44[0, 0, 0] : i32 from vector<1x1x1xi32>
    %46 = arith.addi %40, %45 : i32
    %c1_14 = arith.constant 1 : index
    %47 = memref.load %arg4[%c1_14] : memref<3xi32, #tpu.memory_space<smem>>
    memref.store %46, %arg4[%c1_14] : memref<3xi32, #tpu.memory_space<smem>>
    %c2 = arith.constant 2 : index
    %48 = memref.load %arg4[%c2] : memref<3xi32, #tpu.memory_space<smem>>
    %49 = arith.extui %29 : vector<4x128xi1> to vector<4x128xi32>
    %50 = vector.shape_cast %49 : vector<4x128xi32> to vector<1x4x128xi32>
    %cst_15 = arith.constant dense<0> : vector<1xi32>
    %51 = vector.multi_reduction <add>, %50, %cst_15 [1, 2] : vector<1x4x128xi32> to vector<1xi32>
    %52 = vector.shape_cast %51 : vector<1xi32> to vector<1x1x1xi32>
    %53 = vector.extract %52[0, 0, 0] : i32 from vector<1x1x1xi32>
    %54 = arith.addi %48, %53 : i32
    %c2_16 = arith.constant 2 : index
    %55 = memref.load %arg4[%c2_16] : memref<3xi32, #tpu.memory_space<smem>>
    memref.store %54, %arg4[%c2_16] : memref<3xi32, #tpu.memory_space<smem>>
    %c0_i32_17 = arith.constant 0 : i32
    %56 = arith.cmpi eq, %arg0, %c0_i32_17 : i32
    %57 = arith.extui %56 : i1 to i32
    %c0_i32_18 = arith.constant 0 : i32
    %58 = arith.cmpi ne, %57, %c0_i32_18 : i32
    scf.if %58 {
      %c0_19 = arith.constant 0 : index
      %59 = memref.load %arg4[%c0_19] : memref<3xi32, #tpu.memory_space<smem>>
      %60 = arith.sitofp %59 : i32 to f32
      %c1_20 = arith.constant 1 : index
      %61 = memref.load %arg4[%c1_20] : memref<3xi32, #tpu.memory_space<smem>>
      %62 = arith.sitofp %61 : i32 to f32
      %c2_21 = arith.constant 2 : index
      %63 = memref.load %arg4[%c2_21] : memref<3xi32, #tpu.memory_space<smem>>
      %64 = arith.sitofp %63 : i32 to f32
      %65 = arith.addf %62, %64 : f32
      %66 = arith.subf %65, %60 : f32
      %67 = arith.divf %60, %66 : f32
      %c0_22 = arith.constant 0 : index
      %68 = memref.load %arg3[%c0_22] : memref<1xf32, #tpu.memory_space<smem>>
      memref.store %67, %arg3[%c0_22] : memref<1xf32, #tpu.memory_space<smem>>
    } else {
    }
    return
  }
  func.func @transform_0(%arg0: i32) -> (i32, i32) {
    %c0_i32 = arith.constant 0 : i32
    %c0_i32_0 = arith.constant 0 : i32
    return %arg0, %c0_i32 : i32, i32
  }
  func.func @transform_1(%arg0: i32) -> (i32, i32) {
    %c0_i32 = arith.constant 0 : i32
    %c0_i32_0 = arith.constant 0 : i32
    return %arg0, %c0_i32 : i32, i32
  }
  func.func @transform_2(%arg0: i32) -> i32 {
    %c0_i32 = arith.constant 0 : i32
    %c0_i32_0 = arith.constant 0 : i32
    return %c0_i32 : i32
  }
}

</mosaic_0001>

<llo_original>
// kernel: tpu_custom_call.1
$region0: #{tpu_custom_call.1}
  #allocation0 [shape = 'u32[]', space=smem, size = 0x4, offset = 0x4, fixed_abs, tag = 'smem constant byte address 0x4 - core index']
  #allocation1 [shape = 'u32[144,128]{1,0:T(1,128)}', space=vmem, size = 0x12000, scoped, tag = 'internal scratch']
  #allocation2 [shape = 's32[3]{0:T(128)}', space=smem, size = 0x200, scoped, tag = 'scratch operand']
  %s0 = inlined_call_operand.hbm [shape: f32[4,128], index: 0, kind: input, shape index: {}]
  %s1 = inlined_call_operand.hbm [shape: f32[4,128], index: 1, kind: input, shape index: {}]
  %s2 = inlined_call_operand.hbm [shape: f32[1], index: 2, kind: output, shape index: {}]
  %s3 = sld [smem:[#allocation0]]
  $region34: #{tpu_custom_call.1} parent=0
    _
  %s5 = ssub.s32 1, %s3
  %s6 = scalar_select 0, %s5, %s3
  $region1: #{tpu_custom_call.1} parent=0
    #allocation3 [shape = 'u8[2048]{0}', space=vmem, size = 0x800, scoped, tag = 'input window, operand 0, single buffered']
    #allocation4 [shape = 's32[1]{0}', space=sflag, size = 0x4, scoped, tag = 'scoped memory for tpu_custom_call.1']
    #allocation5 [shape = 's32[1]{0}', space=sflag, size = 0x4, scoped, tag = 'scoped memory for tpu_custom_call.1']
    #allocation6 [shape = 'u8[2048]{0}', space=vmem, size = 0x800, scoped, tag = 'input window, operand 1, single buffered']
    #allocation7 [shape = 's32[1]{0}', space=sflag, size = 0x4, scoped, tag = 'scoped memory for tpu_custom_call.1']
    #allocation8 [shape = 'u8[512]{0}', space=smem, size = 0x200, scoped, tag = 'output window, operand 0, single buffered']
    %7 = vsyncpa [#allocation4], 0
    %8 = vsyncpa [#allocation7], 0
    %9 = vsyncpa [#allocation5], 0
    // Predicated region
    $region2: #{tpu_custom_call.1} parent=1 // pred_check
      _
    $region3: #{tpu_custom_call.1} parent=1 // pred_check_branch
      %11 = sbr.rel (0) target = $region5
    $region4: #{tpu_custom_call.1} parent=1 // pred_region
      %s13 = ssub.s32 64, 64
      %14 = vsyncadd [#allocation4], %s13
      %s16 = sshll.u32 [#allocation3], 4
      %s17 = int_to_ptr.vmem [resolvable:$true] %s16
      %19 = dma.hbm_to_vmem [thread:$0]  %s0, 64, %s17, [#allocation4]
    $region5: #{tpu_custom_call.1} parent=1 // pred_fallthru
      _
    // Predicated region
    $region6: #{tpu_custom_call.1} parent=1 // pred_check
      _
    $region7: #{tpu_custom_call.1} parent=1 // pred_check_branch
      %21 = sbr.rel (0) target = $region9
    $region8: #{tpu_custom_call.1} parent=1 // pred_region
      %s23 = ssub.s32 64, 64
      %24 = vsyncadd [#allocation7], %s23
      %s26 = sshll.u32 [#allocation6], 4
      %s27 = int_to_ptr.vmem [resolvable:$true] %s26
      %29 = dma.hbm_to_vmem [thread:$0]  %s1, 64, %s27, [#allocation7]
    $region9: #{tpu_custom_call.1} parent=1 // pred_fallthru
      _
    // Predicated region
    $region10: #{tpu_custom_call.1} parent=1 // pred_check
      _
    $region11: #{tpu_custom_call.1} parent=1 // pred_check_branch
      %31 = sbr.rel (0) target = $region13
    $region12: #{tpu_custom_call.1} parent=1 // pred_region
      %32 = dma.done [#allocation4], 64
    $region13: #{tpu_custom_call.1} parent=1 // pred_fallthru
      _
    // Predicated region
    $region14: #{tpu_custom_call.1} parent=1 // pred_check
      _
    $region15: #{tpu_custom_call.1} parent=1 // pred_check_branch
      %34 = sbr.rel (0) target = $region17
    $region16: #{tpu_custom_call.1} parent=1 // pred_region
      %35 = dma.done [#allocation7], 64
    $region17: #{tpu_custom_call.1} parent=1 // pred_fallthru
      _
    %p36 = scmp.eq.s32.totalorder 0, 0
    // Predicated region
    $region18: #{tpu_custom_call.1} parent=1 // pred_check
      %p37 = pneg %p36
    $region19: #{tpu_custom_call.1} parent=1 // pred_check_branch
      %39 = sbr.rel (%p37) target = $region21
    $region20: #{tpu_custom_call.1} parent=1 // pred_region
      %s40 = scalar_lea.smem [#allocation2], 0
      %41 = sst [smem:[%s40]] 0
      %s42 = scalar_lea.smem [#allocation2], 1
      %43 = sst [smem:[%s42]] 0
      %s44 = scalar_lea.smem [#allocation2], 2
      %45 = sst [smem:[%s44]] 0
    $region21: #{tpu_custom_call.1} parent=1 // pred_fallthru
      _
    %v46 = vld [vmem:[#allocation3] sm:$0xf]
    %v47 = vld [vmem:[#allocation6] sm:$0xf]
    %v48 = vlaneseq
    %v49 = vshrl.u32 %v48, 7
    %s50 = smul.u32 0, 4
    %v51 = vstv %s50
    %v52 = vadd.s32 %v49, %v51
    %v53 = vlaneseq
    %v54 = vand.u32 %v53, 127
    %vm55 = vcmp.lt.s32.totalorder %v52, 4
    %vm56 = vcmp.eq.s32.totalorder %v52, 4
    %vm57 = vcmp.lt.s32.totalorder %v54, 0
    %vm58 = vmand %vm56, %vm57
    %vm59 = vmor %vm55, %vm58
    %vm60 = vcmp.ge.f32.partialorder %v47, 0.0
    %vm61 = vcmp.le.f32.partialorder %v47, 1.0
    %vm62 = vmand %vm60, %vm61
    %vm63 = vmand %vm62, %vm59
    %vm64 = vcmp.ge.f32.partialorder %v46, 0.0
    %vm65 = vcmp.le.f32.partialorder %v46, 1.0
    %vm66 = vmand %vm64, %vm65
    %vm67 = vmand %vm66, %vm59
    %vm68 = vcmp.eq.f32.partialorder %v47, %v46
    %vm69 = vmand %vm68, %vm63
    %s70 = sld [smem:[#allocation2]]
    %v71 = vsel %vm69, 1, 0
    %vm72 = vcmask 1043456
    %v73 = vsel %vm72, %v71, 0
    %v74 = vand.u32 %v73, 65535
    %v75 = vshrl.u32 %v73, 16
    %v76 = vcvt.s32.f32 %v74
    %v77 = vcvt.s32.f32 %v75
    %78 = vadd.xlane.f32.xlu0 %v76
    %v79 = vpop.xlane.xlu0 %78
    %80 = vadd.xlane.f32.xlu0 %v77
    %v81 = vpop.xlane.xlu0 %80
    %v82 = vcvt.f32.s32 %v79
    %v83 = vcvt.f32.s32 %v81
    %v84 = vshll.u32 %v83, 16
    %v85 = vadd.s32 %v84, %v82
    %v86 = vrot.slane %v85, 4
    %v87 = vadd.s32 %v85, %v86
    %v88 = vrot.slane %v87, 2
    %v89 = vadd.s32 %v87, %v88
    %v90 = vrot.slane %v89, 1
    %v91 = vadd.s32 %v89, %v90
    %s92 = vtos %v91
    %s93 = sadd.s32 %s70, %s92
    %s94 = scalar_lea.smem [#allocation2], 0
    %95 = sst [smem:[%s94]] %s93
    %s96 = sld [smem:[#allocation2 + $0x1]]
    %v97 = vsel %vm63, 1, 0
    %v98 = vsel %vm72, %v97, 0
    %v99 = vand.u32 %v98, 65535
    %v100 = vshrl.u32 %v98, 16
    %v101 = vcvt.s32.f32 %v99
    %v102 = vcvt.s32.f32 %v100
    %103 = vadd.xlane.f32.xlu0 %v101
    %v104 = vpop.xlane.xlu0 %103
    %105 = vadd.xlane.f32.xlu0 %v102
    %v106 = vpop.xlane.xlu0 %105
    %v107 = vcvt.f32.s32 %v104
    %v108 = vcvt.f32.s32 %v106
    %v109 = vshll.u32 %v108, 16
    %v110 = vadd.s32 %v109, %v107
    %v111 = vrot.slane %v110, 4
    %v112 = vadd.s32 %v110, %v111
    %v113 = vrot.slane %v112, 2
    %v114 = vadd.s32 %v112, %v113
    %v115 = vrot.slane %v114, 1
    %v116 = vadd.s32 %v114, %v115
    %s117 = vtos %v116
    %s118 = sadd.s32 %s96, %s117
    %s119 = scalar_lea.smem [#allocation2], 1
    %120 = sst [smem:[%s119]] %s118
    %s121 = sld [smem:[#allocation2 + $0x2]]
    %v122 = vsel %vm67, 1, 0
    %v123 = vsel %vm72, %v122, 0
    %v124 = vand.u32 %v123, 65535
    %v125 = vshrl.u32 %v123, 16
    %v126 = vcvt.s32.f32 %v124
    %v127 = vcvt.s32.f32 %v125
    %128 = vadd.xlane.f32.xlu0 %v126
    %v129 = vpop.xlane.xlu0 %128
    %130 = vadd.xlane.f32.xlu0 %v127
    %v131 = vpop.xlane.xlu0 %130
    %v132 = vcvt.f32.s32 %v129
    %v133 = vcvt.f32.s32 %v131
    %v134 = vshll.u32 %v133, 16
    %v135 = vadd.s32 %v134, %v132
    %v136 = vrot.slane %v135, 4
    %v137 = vadd.s32 %v135, %v136
    %v138 = vrot.slane %v137, 2
    %v139 = vadd.s32 %v137, %v138
    %v140 = vrot.slane %v139, 1
    %v141 = vadd.s32 %v139, %v140
    %s142 = vtos %v141
    %s143 = sadd.s32 %s121, %s142
    %s144 = scalar_lea.smem [#allocation2], 2
    %145 = sst [smem:[%s144]] %s143
    // Predicated region
    $region22: #{tpu_custom_call.1} parent=1 // pred_check
      %p146 = pneg %p36
    $region23: #{tpu_custom_call.1} parent=1 // pred_check_branch
      %148 = sbr.rel (%p146) target = $region25
    $region24: #{tpu_custom_call.1} parent=1 // pred_region
      %s149 = sld [smem:[#allocation2]]
      %s150 = scvt.s32.f32 %s149
      %s151 = sld [smem:[#allocation2 + $0x1]]
      %s152 = scvt.s32.f32 %s151
      %s153 = sld [smem:[#allocation2 + $0x2]]
      %s154 = scvt.s32.f32 %s153
      %s155 = sadd.f32 %s152, %s154
      %s156 = ssub.f32 %s155, %s150
      %v157 = vstv %s156
      %v158 = vrcp.pop %v157
      %s159 = vtos %v158
      %s160 = smul.f32 %s150, %s159
      %s161 = scalar_lea.smem [#allocation8], 0
      %162 = sst [smem:[%s161]] %s160
    $region25: #{tpu_custom_call.1} parent=1 // pred_fallthru
      _
    // Predicated region
    $region26: #{tpu_custom_call.1} parent=1 // pred_check
      _
    $region27: #{tpu_custom_call.1} parent=1 // pred_check_branch
      %164 = sbr.rel (0) target = $region29
    $region28: #{tpu_custom_call.1} parent=1 // pred_region
      %s166 = ssub.s32 16, 16
      %167 = vsyncadd [#allocation5], %s166
      %170 = dma.smem_to_hbm [#allocation8], 16, %s2, [#allocation5]
    $region29: #{tpu_custom_call.1} parent=1 // pred_fallthru
      _
    // Predicated region
    $region30: #{tpu_custom_call.1} parent=1 // pred_check
      _
    $region31: #{tpu_custom_call.1} parent=1 // pred_check_branch
      %172 = sbr.rel (0) target = $region33
    $region32: #{tpu_custom_call.1} parent=1 // pred_region
      %173 = dma.done [#allocation5], 16
    $region33: #{tpu_custom_call.1} parent=1 // pred_fallthru
      _
    %174 = sfence
    %175 = vsyncpa [#allocation4], 1
    %176 = vsyncpa [#allocation7], 1
    %177 = vsyncpa [#allocation5], 1

</llo_original>
